<compile_context>
chip_gen: v7x
topology: tpu7x:2x2x1
jax: 0.10.0
libtpu: 0.0.40
codegen_flags: <defaults>
</compile_context>

<pallas_src>
import jax
import jax.numpy as jnp
from jax.experimental import pallas as pl
from jax.experimental.pallas import tpu as pltpu

# RLlib's FLOAT_MIN used in torch.clamp(torch.log(action_mask), min=FLOAT_MIN)
FLOAT_MIN = -3.4e38

# ----------------------------- model dims (small, synthetic) -----------------
BATCH = 8
OBS_DIM = 32
FCNET_HIDDENS = [32, 32]          # model_config["fcnet_hiddens"]
NUM_OUTPUTS = 16                  # flattened action space size
HEAD_PAD = 128                    # lane-dense head width: [logits(16) | value(1) | pad]

TB_MAX = 1024                     # max batch-tile rows (big tiles amortize step overhead)
SINGLE_TILE_MAX = 256             # below this, a single tile (no megacore split)


def _action_mask_kernel(
    obs_ref, mask_ref,
    w1_ref, b1_ref, w2_ref, b2_ref,
    wh_ref, bh_ref,
    out_ref,
):
    """One batch tile per grid step. Weights stay resident across steps.

    out_ref is a lane-dense (TB, 128) slab: columns [0:NUM_OUTPUTS] = masked
    logits, column NUM_OUTPUTS = value, remaining columns = padding.

    NOTE: the `where(mask > 0, 0, FLOAT_MIN)` shortcut is equivalent to
    `clamp(log(mask), min=FLOAT_MIN)` only for binary {0,1} masks, which is the
    contract of this module's discrete action mask.
    """
    obs = obs_ref[...]                                     # (TB, OBS_DIM) f32

    # TorchFC hidden layers: Linear -> tanh, Linear -> tanh (fcnet_activation="tanh")
    h = jnp.tanh(
        jnp.dot(obs, w1_ref[...], preferred_element_type=jnp.float32) + b1_ref[...]
    )
    h = jnp.tanh(
        jnp.dot(h, w2_ref[...], preferred_element_type=jnp.float32) + b2_ref[...]
    )

    # Fused heads: [action_head | value_head | zero-pad] in one MXU pass.
    head = jnp.dot(h, wh_ref[...], preferred_element_type=jnp.float32) + bh_ref[...]

    # Full lane-dense store of the head slab, then overwrite the first
    # NUM_OUTPUTS lanes with the masked logits. mask_ref is the raw
    # (TB, NUM_OUTPUTS) mask; the narrow overwrite is a cheap VMEM masked store
    # while the HBM writeback stays a single unmasked 128-lane stream.
    out_ref[...] = head
    add = jnp.where(mask_ref[...] > 0.0,
                    jnp.float32(0.0), jnp.float32(FLOAT_MIN))     # (TB, 16)
    out_ref[:, :NUM_OUTPUTS] = head[:, :NUM_OUTPUTS] + add


def _round_up(x, m):
    return ((x + m - 1) // m) * m


def _choose_tiling(batch):
    """Pick (tb, pad_b, n_blk): tb multiple of 8, tb <= TB_MAX.

    Small batches -> one tile. Larger batches -> an even number of tiles (>= 2)
    so the "parallel" batch axis can shard across v7x's two TensorCores.
    """
    b8 = _round_up(batch, 8)
    if b8 <= SINGLE_TILE_MAX:
        return b8, b8, 1
    n_blk = 2 * ((b8 + 2 * TB_MAX - 1) // (2 * TB_MAX))     # even, >= 2
    tb = _round_up((b8 + n_blk - 1) // n_blk, 8)
    pad_b = tb * n_blk
    return tb, pad_b, n_blk


def action_mask_model_forward(observations, action_mask, params):
    """Returns (masked_logits, value) mirroring forward() + value_function()."""
    observations = observations.astype(jnp.float32)
    action_mask = action_mask.astype(jnp.float32)
    B = observations.shape[0]
    h1, h2 = FCNET_HIDDENS

    tb, pad_b, n_blk = _choose_tiling(B)

    # ---- pack fused head weights into a lane-dense (h2, 128) slab ------------
    wh = jnp.zeros((h2, HEAD_PAD), jnp.float32)
    wh = wh.at[:, :NUM_OUTPUTS].set(params["wa"])
    wh = wh.at[:, NUM_OUTPUTS:NUM_OUTPUTS + 1].set(params["wv"])
    bh = jnp.zeros((1, HEAD_PAD), jnp.float32)
    bh = bh.at[:, :NUM_OUTPUTS].set(params["ba"])
    bh = bh.at[:, NUM_OUTPUTS:NUM_OUTPUTS + 1].set(params["bv"])

    # ---- batch padding: fast path when already tile-aligned ------------------
    if pad_b == B:
        obs_in, mask_in = observations, action_mask
    else:
        obs_in = jnp.zeros((pad_b, OBS_DIM), jnp.float32).at[:B].set(observations)
        mask_in = jnp.zeros((pad_b, NUM_OUTPUTS), jnp.float32).at[:B].set(action_mask)

    full = lambda shape: pl.BlockSpec(shape, lambda i: (0, 0))  # resident weights

    out = pl.pallas_call(
        _action_mask_kernel,
        out_shape=jax.ShapeDtypeStruct((pad_b, HEAD_PAD), jnp.float32),
        grid=(n_blk,),
        in_specs=[
            pl.BlockSpec((tb, OBS_DIM), lambda i: (i, 0)),       # obs tile
            pl.BlockSpec((tb, NUM_OUTPUTS), lambda i: (i, 0)),   # raw mask tile
            full((OBS_DIM, h1)), full((1, h1)),
            full((h1, h2)), full((1, h2)),
            full((h2, HEAD_PAD)), full((1, HEAD_PAD)),
        ],
        out_specs=pl.BlockSpec((tb, HEAD_PAD), lambda i: (i, 0)),
        compiler_params=pltpu.CompilerParams(
            dimension_semantics=("parallel",)),
    )(
        obs_in, mask_in,
        params["w1"], params["b1"],
        params["w2"], params["b2"],
        wh, bh,
    )

    # Single combined slice of the wide slab, then split (avoids re-reading the
    # 128-wide slab twice).
    head_out = out[:B, :NUM_OUTPUTS + 1]
    logits = head_out[:, :NUM_OUTPUTS]
    value = head_out[:, NUM_OUTPUTS]
    return logits, value


def init_params(key):
    """Deterministic synthetic parameter init (shapes follow the module __init__)."""
    ks = jax.random.split(key, 5)
    h1, h2 = FCNET_HIDDENS
    scale = 0.1
    return {
        # internal_model hidden layers
        "w1": scale * jax.random.normal(ks[0], (OBS_DIM, h1), jnp.float32),
        "b1": jnp.zeros((1, h1), jnp.float32),
        "w2": scale * jax.random.normal(ks[1], (h1, h2), jnp.float32),
        "b2": jnp.zeros((1, h2), jnp.float32),
        # action_head = nn.Linear(last_layer_size, num_outputs)
        "wa": scale * jax.random.normal(ks[2], (h2, NUM_OUTPUTS), jnp.float32),
        "ba": jnp.zeros((1, NUM_OUTPUTS), jnp.float32),
        # value_head = nn.Linear(last_layer_size, 1)
        "wv": scale * jax.random.normal(ks[3], (h2, 1), jnp.float32),
        "bv": jnp.zeros((1, 1), jnp.float32),
    }


def _reference(observations, action_mask, params):
    """Pure-JAX reference mirroring the PyTorch module exactly."""
    h = jnp.tanh(observations @ params["w1"] + params["b1"])
    h = jnp.tanh(h @ params["w2"] + params["b2"])
    logits = h @ params["wa"] + params["ba"]
    logits = logits + jnp.maximum(jnp.log(action_mask), FLOAT_MIN)
    value = jnp.squeeze(h @ params["wv"] + params["bv"], axis=-1)
    return logits, value


def _make_inputs(key, batch):
    k_obs, k_mask = jax.random.split(key)
    observations = jax.random.normal(k_obs, (batch, OBS_DIM), jnp.float32)
    # binary action mask; force first action valid so each row has >=1 valid action
    action_mask = jax.random.bernoulli(k_mask, 0.5, (batch, NUM_OUTPUTS)).astype(jnp.float32)
    action_mask = action_mask.at[:, 0].set(1.0)
    return observations, action_mask


if __name__ == "__main__":
    key = jax.random.PRNGKey(0)
    k_in, k_in2, k_params = jax.random.split(key, 3)
    params = init_params(k_params)

    # --- small inference-style batch (single grid step, aligned fast path) ----
    observations, action_mask = _make_inputs(k_in, BATCH)
    logits, value = action_mask_model_forward(observations, action_mask, params)
    jax.block_until_ready((logits, value))

    ref_logits, ref_value = _reference(observations, action_mask, params)
    assert logits.shape == (BATCH, NUM_OUTPUTS)
    assert value.shape == (BATCH,)
    assert jnp.allclose(logits, ref_logits, atol=1e-5, rtol=1e-5)
    assert jnp.allclose(value, ref_value, atol=1e-5, rtol=1e-5)

    # --- larger training-style batch (exercises 2-tile grid + batch padding) --
    B2 = 300
    observations2, action_mask2 = _make_inputs(k_in2, B2)
    logits2, value2 = action_mask_model_forward(observations2, action_mask2, params)
    jax.block_until_ready((logits2, value2))

    ref_logits2, ref_value2 = _reference(observations2, action_mask2, params)
    assert logits2.shape == (B2, NUM_OUTPUTS)
    assert value2.shape == (B2,)
    assert jnp.allclose(logits2, ref_logits2, atol=1e-5, rtol=1e-5)
    assert jnp.allclose(value2, ref_value2, atol=1e-5, rtol=1e-5)

    print("KERNEL_OK")
</pallas_src>

<mosaic_0001>
module attributes {stable_mosaic.version = 11 : i64} {
  func.func @_action_mask_kernel(%arg0: i32, %arg1: memref<8x32xf32, #tpu.memory_space<vmem>>, %arg2: memref<8x16xf32, #tpu.memory_space<vmem>>, %arg3: memref<32x32xf32, #tpu.memory_space<vmem>>, %arg4: memref<1x32xf32, #tpu.memory_space<vmem>>, %arg5: memref<32x32xf32, #tpu.memory_space<vmem>>, %arg6: memref<1x32xf32, #tpu.memory_space<vmem>>, %arg7: memref<32x128xf32, #tpu.memory_space<vmem>>, %arg8: memref<1x128xf32, #tpu.memory_space<vmem>>, %arg9: memref<8x128xf32, #tpu.memory_space<vmem>>) attributes {dimension_semantics = [#tpu.dimension_semantics<parallel>], iteration_bounds = array<i64: 1>, scalar_prefetch = 0 : i64, scratch_operands = 0 : i64, tpu.core_type = #tpu.core_type<tc>, window_params = [{transform_indices = @transform_0, window_bounds = array<i64: 8, 32>}, {transform_indices = @transform_1, window_bounds = array<i64: 8, 16>}, {pipeline_mode = #tpu.pipeline_mode<synchronous>, transform_indices = @transform_2, window_bounds = array<i64: 32, 32>}, {pipeline_mode = #tpu.pipeline_mode<synchronous>, transform_indices = @transform_3, window_bounds = array<i64: 1, 32>}, {pipeline_mode = #tpu.pipeline_mode<synchronous>, transform_indices = @transform_4, window_bounds = array<i64: 32, 32>}, {pipeline_mode = #tpu.pipeline_mode<synchronous>, transform_indices = @transform_5, window_bounds = array<i64: 1, 32>}, {pipeline_mode = #tpu.pipeline_mode<synchronous>, transform_indices = @transform_6, window_bounds = array<i64: 32, 128>}, {pipeline_mode = #tpu.pipeline_mode<synchronous>, transform_indices = @transform_7, window_bounds = array<i64: 1, 128>}, {transform_indices = @transform_8, window_bounds = array<i64: 8, 128>}]} {
    %c0 = arith.constant 0 : index
    %c0_0 = arith.constant 0 : index
    %0 = vector.load %arg1[%c0, %c0_0] : memref<8x32xf32, #tpu.memory_space<vmem>>, vector<8x32xf32>
    %c0_1 = arith.constant 0 : index
    %c0_2 = arith.constant 0 : index
    %1 = vector.load %arg3[%c0_1, %c0_2] : memref<32x32xf32, #tpu.memory_space<vmem>>, vector<32x32xf32>
    %cst = arith.constant dense<0.000000e+00> : vector<8x32xf32>
    %2 = tpu.matmul %0, %1, %cst {dimension_numbers = #tpu.dot_dimension_numbers<[1], [0], [0], [1], [0, 0, 1, 1], [], []>} : vector<8x32xf32>, vector<32x32xf32>, vector<8x32xf32> -> vector<8x32xf32>
    %c0_3 = arith.constant 0 : index
    %c0_4 = arith.constant 0 : index
    %3 = vector.load %arg4[%c0_3, %c0_4] : memref<1x32xf32, #tpu.memory_space<vmem>>, vector<1x32xf32>
    %4 = vector.broadcast %3 : vector<1x32xf32> to vector<8x32xf32>
    %5 = arith.addf %2, %4 : vector<8x32xf32>
    %6 = math.tanh %5 : vector<8x32xf32>
    %c0_5 = arith.constant 0 : index
    %c0_6 = arith.constant 0 : index
    %7 = vector.load %arg5[%c0_5, %c0_6] : memref<32x32xf32, #tpu.memory_space<vmem>>, vector<32x32xf32>
    %cst_7 = arith.constant dense<0.000000e+00> : vector<8x32xf32>
    %8 = tpu.matmul %6, %7, %cst_7 {dimension_numbers = #tpu.dot_dimension_numbers<[1], [0], [0], [1], [0, 0, 1, 1], [], []>} : vector<8x32xf32>, vector<32x32xf32>, vector<8x32xf32> -> vector<8x32xf32>
    %c0_8 = arith.constant 0 : index
    %c0_9 = arith.constant 0 : index
    %9 = vector.load %arg6[%c0_8, %c0_9] : memref<1x32xf32, #tpu.memory_space<vmem>>, vector<1x32xf32>
    %10 = vector.broadcast %9 : vector<1x32xf32> to vector<8x32xf32>
    %11 = arith.addf %8, %10 : vector<8x32xf32>
    %12 = math.tanh %11 : vector<8x32xf32>
    %c0_10 = arith.constant 0 : index
    %c0_11 = arith.constant 0 : index
    %13 = vector.load %arg7[%c0_10, %c0_11] : memref<32x128xf32, #tpu.memory_space<vmem>>, vector<32x128xf32>
    %cst_12 = arith.constant dense<0.000000e+00> : vector<8x128xf32>
    %14 = tpu.matmul %12, %13, %cst_12 {dimension_numbers = #tpu.dot_dimension_numbers<[1], [0], [0], [1], [0, 0, 1, 1], [], []>} : vector<8x32xf32>, vector<32x128xf32>, vector<8x128xf32> -> vector<8x128xf32>
    %c0_13 = arith.constant 0 : index
    %c0_14 = arith.constant 0 : index
    %15 = vector.load %arg8[%c0_13, %c0_14] : memref<1x128xf32, #tpu.memory_space<vmem>>, vector<1x128xf32>
    %16 = vector.broadcast %15 : vector<1x128xf32> to vector<8x128xf32>
    %17 = arith.addf %14, %16 : vector<8x128xf32>
    %c0_15 = arith.constant 0 : index
    %c0_16 = arith.constant 0 : index
    %18 = vector.load %arg9[%c0_15, %c0_16] : memref<8x128xf32, #tpu.memory_space<vmem>>, vector<8x128xf32>
    tpu.vector_store %arg9[%c0_15, %c0_16], %17 {strides = array<i32>} : memref<8x128xf32, #tpu.memory_space<vmem>>, vector<8x128xf32>,
    %c0_17 = arith.constant 0 : index
    %c0_18 = arith.constant 0 : index
    %19 = vector.load %arg2[%c0_17, %c0_18] : memref<8x16xf32, #tpu.memory_space<vmem>>, vector<8x16xf32>
    %cst_19 = arith.constant 0.000000e+00 : f32
    %20 = vector.broadcast %cst_19 : f32 to vector<8x16xf32>
    %21 = arith.cmpf ogt, %19, %20 : vector<8x16xf32>
    %cst_20 = arith.constant 0.000000e+00 : f32
    %cst_21 = arith.constant -3.400000e+38 : f32
    %22 = vector.broadcast %cst_20 : f32 to vector<8x16xf32>
    %23 = vector.broadcast %cst_21 : f32 to vector<8x16xf32>
    %24 = arith.select %21, %22, %23 : vector<8x16xi1>, vector<8x16xf32>
    %25 = vector.extract_strided_slice %17 {offsets = [0, 0], sizes = [8, 16], strides = [1, 1]} : vector<8x128xf32> to vector<8x16xf32>
    %26 = arith.addf %25, %24 : vector<8x16xf32>
    %c0_22 = arith.constant 0 : index
    %c0_23 = arith.constant 0 : index
    %27 = vector.load %arg9[%c0_22, %c0_23] : memref<8x128xf32, #tpu.memory_space<vmem>>, vector<8x16xf32>
    tpu.vector_store %arg9[%c0_22, %c0_23], %26 {strides = array<i32>} : memref<8x128xf32, #tpu.memory_space<vmem>>, vector<8x16xf32>,
    return
  }
  func.func @transform_0(%arg0: i32) -> (i32, i32) {
    %c0_i32 = arith.constant 0 : i32
    %c0_i32_0 = arith.constant 0 : i32
    return %arg0, %c0_i32 : i32, i32
  }
  func.func @transform_1(%arg0: i32) -> (i32, i32) {
    %c0_i32 = arith.constant 0 : i32
    %c0_i32_0 = arith.constant 0 : i32
    return %arg0, %c0_i32 : i32, i32
  }
  func.func @transform_2(%arg0: i32) -> (i32, i32) {
    %c0_i32 = arith.constant 0 : i32
    %c0_i32_0 = arith.constant 0 : i32
    %c0_i32_1 = arith.constant 0 : i32
    return %c0_i32, %c0_i32_0 : i32, i32
  }
  func.func @transform_3(%arg0: i32) -> (i32, i32) {
    %c0_i32 = arith.constant 0 : i32
    %c0_i32_0 = arith.constant 0 : i32
    %c0_i32_1 = arith.constant 0 : i32
    return %c0_i32, %c0_i32_0 : i32, i32
  }
  func.func @transform_4(%arg0: i32) -> (i32, i32) {
    %c0_i32 = arith.constant 0 : i32
    %c0_i32_0 = arith.constant 0 : i32
    %c0_i32_1 = arith.constant 0 : i32
    return %c0_i32, %c0_i32_0 : i32, i32
  }
  func.func @transform_5(%arg0: i32) -> (i32, i32) {
    %c0_i32 = arith.constant 0 : i32
    %c0_i32_0 = arith.constant 0 : i32
    %c0_i32_1 = arith.constant 0 : i32
    return %c0_i32, %c0_i32_0 : i32, i32
  }
  func.func @transform_6(%arg0: i32) -> (i32, i32) {
    %c0_i32 = arith.constant 0 : i32
    %c0_i32_0 = arith.constant 0 : i32
    %c0_i32_1 = arith.constant 0 : i32
    return %c0_i32, %c0_i32_0 : i32, i32
  }
  func.func @transform_7(%arg0: i32) -> (i32, i32) {
    %c0_i32 = arith.constant 0 : i32
    %c0_i32_0 = arith.constant 0 : i32
    %c0_i32_1 = arith.constant 0 : i32
    return %c0_i32, %c0_i32_0 : i32, i32
  }
  func.func @transform_8(%arg0: i32) -> (i32, i32) {
    %c0_i32 = arith.constant 0 : i32
    %c0_i32_0 = arith.constant 0 : i32
    return %arg0, %c0_i32 : i32, i32
  }
}

</mosaic_0001>

<llo_original>
// kernel: tpu_custom_call.1
$region0: #{tpu_custom_call.1}
  #allocation0 [shape = 'u32[]', space=smem, size = 0x4, offset = 0x4, fixed_abs, tag = 'smem constant byte address 0x4 - core index']
  #allocation1 [shape = 'u32[144,128]{1,0:T(1,128)}', space=vmem, size = 0x12000, scoped, tag = 'internal scratch']
  %s0 = inlined_call_operand.hbm [shape: f32[8,32], index: 0, kind: input, shape index: {}]
  %s1 = inlined_call_operand.hbm [shape: f32[8,16], index: 1, kind: input, shape index: {}]
  %s2 = inlined_call_operand.hbm [shape: f32[32,32], index: 2, kind: input, shape index: {}]
  %s3 = inlined_call_operand.vmem [shape: f32[1,32], index: 3, kind: input, shape index: {}]
  %s4 = inlined_call_operand.hbm [shape: f32[32,32], index: 4, kind: input, shape index: {}]
  %s5 = inlined_call_operand.vmem [shape: f32[1,32], index: 5, kind: input, shape index: {}]
  %s6 = inlined_call_operand.hbm [shape: f32[32,128], index: 6, kind: input, shape index: {}]
  %s7 = inlined_call_operand.vmem [shape: f32[1,128], index: 7, kind: input, shape index: {}]
  %s8 = inlined_call_operand.hbm [shape: f32[8,128], index: 8, kind: output, shape index: {}]
  %s9 = sld [smem:[#allocation0]]
  $region62: #{tpu_custom_call.1} parent=0
    _
  %s11 = ssub.s32 1, %s9
  %s12 = scalar_select 0, %s11, %s9
  $region1: #{tpu_custom_call.1} parent=0
    #allocation2 [shape = 'u8[4096]{0}', space=vmem, size = 0x1000, scoped, tag = 'input window, operand 0, single buffered']
    #allocation3 [shape = 's32[1]{0}', space=sflag, size = 0x4, scoped, tag = 'scoped memory for tpu_custom_call.1']
    #allocation4 [shape = 's32[1]{0}', space=sflag, size = 0x4, scoped, tag = 'scoped memory for tpu_custom_call.1']
    #allocation5 [shape = 'u8[4096]{0}', space=vmem, size = 0x1000, scoped, tag = 'input window, operand 1, single buffered']
    #allocation6 [shape = 's32[1]{0}', space=sflag, size = 0x4, scoped, tag = 'scoped memory for tpu_custom_call.1']
    #allocation7 [shape = 'u8[16384]{0}', space=vmem, size = 0x4000, scoped, tag = 'input window, operand 2, single buffered']
    #allocation8 [shape = 'u8[16384]{0}', space=vmem, size = 0x4000, scoped, tag = 'input window, operand 4, single buffered']
    #allocation9 [shape = 's32[1]{0}', space=sflag, size = 0x4, scoped, tag = 'scoped memory for tpu_custom_call.1']
    #allocation10 [shape = 'u8[16384]{0}', space=vmem, size = 0x4000, scoped, tag = 'input window, operand 6, single buffered']
    #allocation11 [shape = 'u8[4096]{0}', space=vmem, size = 0x1000, scoped, tag = 'output window, operand 0, single buffered']
    %13 = vsyncpa [#allocation3], 0
    %14 = vsyncpa [#allocation6], 0
    %15 = vsyncpa [#allocation9], 0
    %16 = vsyncpa [#allocation4], 0
    // Predicated region
    $region2: #{tpu_custom_call.1} parent=1 // pred_check
      _
    $region3: #{tpu_custom_call.1} parent=1 // pred_check_branch
      %18 = sbr.rel (0) target = $region5
    $region4: #{tpu_custom_call.1} parent=1 // pred_region
      %s20 = ssub.s32 128, 128
      %21 = vsyncadd [#allocation3], %s20
      %s23 = sshll.u32 [#allocation2], 4
      %s24 = int_to_ptr.vmem [resolvable:$true] %s23
      %26 = dma.hbm_to_vmem [thread:$0]  %s0, 128, %s24, [#allocation3]
    $region5: #{tpu_custom_call.1} parent=1 // pred_fallthru
      _
    // Predicated region
    $region6: #{tpu_custom_call.1} parent=1 // pred_check
      _
    $region7: #{tpu_custom_call.1} parent=1 // pred_check_branch
      %28 = sbr.rel (0) target = $region9
    $region8: #{tpu_custom_call.1} parent=1 // pred_region
      %s30 = ssub.s32 128, 128
      %31 = vsyncadd [#allocation6], %s30
      %s33 = sshll.u32 [#allocation5], 4
      %s34 = int_to_ptr.vmem [resolvable:$true] %s33
      %36 = dma.hbm_to_vmem [thread:$0]  %s1, 128, %s34, [#allocation6]
    $region9: #{tpu_custom_call.1} parent=1 // pred_fallthru
      _
    // Predicated region
    $region10: #{tpu_custom_call.1} parent=1 // pred_check
      _
    $region11: #{tpu_custom_call.1} parent=1 // pred_check_branch
      %38 = sbr.rel (0) target = $region13
    $region12: #{tpu_custom_call.1} parent=1 // pred_region
      %s40 = ssub.s32 512, 512
      %41 = vsyncadd [#allocation6], %s40
      %s42 = sshll.u32 [#allocation7], 4
      %s43 = int_to_ptr.vmem [resolvable:$true] %s42
      %48 = dma.hbm_to_vmem [thread:$0]  %s2, 512, %s43, [#allocation6], 128, 128, 8
    $region13: #{tpu_custom_call.1} parent=1 // pred_fallthru
      _
    // Predicated region
    $region14: #{tpu_custom_call.1} parent=1 // pred_check
      _
    $region15: #{tpu_custom_call.1} parent=1 // pred_check_branch
      %50 = sbr.rel (0) target = $region17
    $region16: #{tpu_custom_call.1} parent=1 // pred_region
      _
    $region17: #{tpu_custom_call.1} parent=1 // pred_fallthru
      _
    // Predicated region
    $region18: #{tpu_custom_call.1} parent=1 // pred_check
      _
    $region19: #{tpu_custom_call.1} parent=1 // pred_check_branch
      %52 = sbr.rel (0) target = $region21
    $region20: #{tpu_custom_call.1} parent=1 // pred_region
      %s54 = ssub.s32 512, 512
      %55 = vsyncadd [#allocation9], %s54
      %s56 = sshll.u32 [#allocation8], 4
      %s57 = int_to_ptr.vmem [resolvable:$true] %s56
      %62 = dma.hbm_to_vmem [thread:$0]  %s4, 512, %s57, [#allocation9], 128, 128, 8
    $region21: #{tpu_custom_call.1} parent=1 // pred_fallthru
      _
    // Predicated region
    $region22: #{tpu_custom_call.1} parent=1 // pred_check
      _
    $region23: #{tpu_custom_call.1} parent=1 // pred_check_branch
      %64 = sbr.rel (0) target = $region25
    $region24: #{tpu_custom_call.1} parent=1 // pred_region
      _
    $region25: #{tpu_custom_call.1} parent=1 // pred_fallthru
      _
    // Predicated region
    $region26: #{tpu_custom_call.1} parent=1 // pred_check
      _
    $region27: #{tpu_custom_call.1} parent=1 // pred_check_branch
      %66 = sbr.rel (0) target = $region29
    $region28: #{tpu_custom_call.1} parent=1 // pred_region
      %s68 = ssub.s32 512, 512
      %69 = vsyncadd [#allocation9], %s68
      %s70 = sshll.u32 [#allocation10], 4
      %s71 = int_to_ptr.vmem [resolvable:$true] %s70
      %76 = dma.hbm_to_vmem [thread:$0]  %s6, 512, %s71, [#allocation9], 128, 128, 8
    $region29: #{tpu_custom_call.1} parent=1 // pred_fallthru
      _
    // Predicated region
    $region30: #{tpu_custom_call.1} parent=1 // pred_check
      _
    $region31: #{tpu_custom_call.1} parent=1 // pred_check_branch
      %78 = sbr.rel (0) target = $region33
    $region32: #{tpu_custom_call.1} parent=1 // pred_region
      _
    $region33: #{tpu_custom_call.1} parent=1 // pred_fallthru
      _
    // Predicated region
    $region34: #{tpu_custom_call.1} parent=1 // pred_check
      _
    $region35: #{tpu_custom_call.1} parent=1 // pred_check_branch
      %80 = sbr.rel (0) target = $region37
    $region36: #{tpu_custom_call.1} parent=1 // pred_region
      %81 = dma.done [#allocation3], 128
    $region37: #{tpu_custom_call.1} parent=1 // pred_fallthru
      _
    // Predicated region
    $region38: #{tpu_custom_call.1} parent=1 // pred_check
      _
    $region39: #{tpu_custom_call.1} parent=1 // pred_check_branch
      %83 = sbr.rel (0) target = $region41
    $region40: #{tpu_custom_call.1} parent=1 // pred_region
      %84 = dma.done [#allocation6], 128
    $region41: #{tpu_custom_call.1} parent=1 // pred_fallthru
      _
    // Predicated region
    $region42: #{tpu_custom_call.1} parent=1 // pred_check
      _
    $region43: #{tpu_custom_call.1} parent=1 // pred_check_branch
      %86 = sbr.rel (0) target = $region45
    $region44: #{tpu_custom_call.1} parent=1 // pred_region
      %87 = dma.done [#allocation6], 512
    $region45: #{tpu_custom_call.1} parent=1 // pred_fallthru
      _
    // Predicated region
    $region46: #{tpu_custom_call.1} parent=1 // pred_check
      _
    $region47: #{tpu_custom_call.1} parent=1 // pred_check_branch
      %89 = sbr.rel (0) target = $region49
    $region48: #{tpu_custom_call.1} parent=1 // pred_region
      %90 = dma.done [#allocation9], 512
    $region49: #{tpu_custom_call.1} parent=1 // pred_fallthru
      _
    // Predicated region
    $region50: #{tpu_custom_call.1} parent=1 // pred_check
      _
    $region51: #{tpu_custom_call.1} parent=1 // pred_check_branch
      %92 = sbr.rel (0) target = $region53
    $region52: #{tpu_custom_call.1} parent=1 // pred_region
      %93 = dma.done [#allocation9], 512
    $region53: #{tpu_custom_call.1} parent=1 // pred_fallthru
      _
    %v94 = vld [vmem:[#allocation2] sm:$0xff]
    %v95 = vld [vmem:[#allocation7] sm:$0xff]
    %v96 = vld [vmem:[#allocation7 + $0x8] sm:$0xff]
    %v97 = vld [vmem:[#allocation7 + $0x10] sm:$0xff]
    %v98 = vld [vmem:[#allocation7 + $0x18] sm:$0xff]
    %v99 = vld [vmem:[%s3] sm:$0x1]
    %v101 = vlaneseq
    %v102 = vshrl.u32 %v101, 7
    %v103 = vsub.s32 0, %v102
    %v104 = vrot.slane %v99, %v103
    %vm106 = vcmask 261120
    %v108 = vsel %vm106, %v94, 0
    %110 = vmatprep.subr.mxu0 0.0
    %111 = vmatpush1.msra.mxu0 %v95
    %112 = vmatprep.subr.mxu0 0.0
    %113 = vmatpush1.msra.mxu0 %v96
    %114 = vmatprep.subr.mxu0 0.0
    %115 = vmatpush1.msra.mxu0 %v97
    %116 = vmatprep.subr.mxu0 0.0
    %117 = vmatpush1.msra.mxu0 %v98
    %118 = vmatprep.subr.mxu0 0.0
    %119 = vmatpush1.msra.mxu0 0.0
    %120 = vmatprep.subr.mxu0 0.0
    %121 = vmatpush1.msra.mxu0 0.0
    %122 = vmatprep.subr.mxu0 0.0
    %123 = vmatpush1.msra.mxu0 0.0
    %124 = vmatprep.subr.mxu0 0.0
    %125 = vmatpush1.msra.mxu0 0.0
    %126 = vmatprep.subr.mxu0 0.0
    %127 = vmatpush1.msra.mxu0 0.0
    %128 = vmatprep.subr.mxu0 0.0
    %129 = vmatpush1.msra.mxu0 0.0
    %130 = vmatprep.subr.mxu0 0.0
    %131 = vmatpush1.msra.mxu0 0.0
    %132 = vmatprep.subr.mxu0 0.0
    %133 = vmatpush1.msra.mxu0 0.0
    %134 = vmatprep.subr.mxu0 0.0
    %135 = vmatpush1.msra.mxu0 0.0
    %136 = vmatprep.subr.mxu0 0.0
    %137 = vmatpush1.msra.mxu0 0.0
    %138 = vmatprep.subr.mxu0 0.0
    %139 = vmatpush1.msra.mxu0 0.0
    %140 = vmatprep.subr.mxu0 0.0
    %141 = vmatpush1.msra.mxu0 0.0
    %142 = vmatprep.subr.mxu0 0.0
    %143 = vmatpush1.msra.mxu0 0.0
    %144 = vmatprep.subr.mxu0 0.0
    %145 = vmatpush1.msra.mxu0 0.0
    %146 = vmatprep.subr.mxu0 0.0
    %147 = vmatpush1.msra.mxu0 0.0
    %148 = vmatprep.subr.mxu0 0.0
    %149 = vmatpush1.msra.mxu0 0.0
    %150 = vmatprep.subr.mxu0 0.0
    %151 = vmatpush1.msra.mxu0 0.0
    %152 = vmatprep.subr.mxu0 0.0
    %153 = vmatpush1.msra.mxu0 0.0
    %154 = vmatprep.subr.mxu0 0.0
    %155 = vmatpush1.msra.mxu0 0.0
    %156 = vmatprep.subr.mxu0 0.0
    %157 = vmatpush1.msra.mxu0 0.0
    %158 = vmatprep.subr.mxu0 0.0
    %159 = vmatpush1.msra.mxu0 0.0
    %160 = vmatprep.subr.mxu0 0.0
    %161 = vmatpush1.msra.mxu0 0.0
    %162 = vmatprep.subr.mxu0 0.0
    %163 = vmatpush1.msra.mxu0 0.0
    %164 = vmatprep.subr.mxu0 0.0
    %165 = vmatpush1.msra.mxu0 0.0
    %166 = vmatprep.subr.mxu0 0.0
    %167 = vmatpush1.msra.mxu0 0.0
    %168 = vmatprep.subr.mxu0 0.0
    %169 = vmatpush1.msra.mxu0 0.0
    %170 = vmatprep.subr.mxu0 0.0
    %171 = vmatpush1.msra.mxu0 0.0
    %172 = vmatprep.subr.mxu0 0.0
    %173 = vmatpush1.msra.mxu0 0.0
    %174 = vmatprep.mubr.f32.mxu0 0.0
    %175 = vmatmul.mubr.f32.gmra.mrb[0].mxu0 %v108
    %v176 = vpop.f32.mrb[0].mxu0
    %v177 = vadd.f32 %v104, %v176
    %v178 = vpop.f32.mrb[0].mxu0
    %179 = vdwg.mxu0
    %v180 = vtanh.pop %v177
    %v181 = vld [vmem:[#allocation8] sm:$0xff]
    %v182 = vld [vmem:[#allocation8 + $0x8] sm:$0xff]
    %v183 = vld [vmem:[#allocation8 + $0x10] sm:$0xff]
    %v184 = vld [vmem:[#allocation8 + $0x18] sm:$0xff]
    %v185 = vld [vmem:[%s5] sm:$0x1]
    %v187 = vlaneseq
    %v188 = vshrl.u32 %v187, 7
    %v189 = vsub.s32 0, %v188
    %v190 = vrot.slane %v185, %v189
    %v193 = vsel %vm106, %v180, 0
    %195 = vmatprep.subr.mxu0 0.0
    %196 = vmatpush1.msra.mxu0 %v181
    %197 = vmatprep.subr.mxu0 0.0
    %198 = vmatpush1.msra.mxu0 %v182
    %199 = vmatprep.subr.mxu0 0.0
    %200 = vmatpush1.msra.mxu0 %v183
    %201 = vmatprep.subr.mxu0 0.0
    %202 = vmatpush1.msra.mxu0 %v184
    %203 = vmatprep.subr.mxu0 0.0
    %204 = vmatpush1.msra.mxu0 0.0
    %205 = vmatprep.subr.mxu0 0.0
    %206 = vmatpush1.msra.mxu0 0.0
    %207 = vmatprep.subr.mxu0 0.0
    %208 = vmatpush1.msra.mxu0 0.0
    %209 = vmatprep.subr.mxu0 0.0
    %210 = vmatpush1.msra.mxu0 0.0
    %211 = vmatprep.subr.mxu0 0.0
    %212 = vmatpush1.msra.mxu0 0.0
    %213 = vmatprep.subr.mxu0 0.0
    %214 = vmatpush1.msra.mxu0 0.0
    %215 = vmatprep.subr.mxu0 0.0
    %216 = vmatpush1.msra.mxu0 0.0
    %217 = vmatprep.subr.mxu0 0.0
    %218 = vmatpush1.msra.mxu0 0.0
    %219 = vmatprep.subr.mxu0 0.0
    %220 = vmatpush1.msra.mxu0 0.0
    %221 = vmatprep.subr.mxu0 0.0
    %222 = vmatpush1.msra.mxu0 0.0
    %223 = vmatprep.subr.mxu0 0.0
    %224 = vmatpush1.msra.mxu0 0.0
    %225 = vmatprep.subr.mxu0 0.0
    %226 = vmatpush1.msra.mxu0 0.0
    %227 = vmatprep.subr.mxu0 0.0
    %228 = vmatpush1.msra.mxu0 0.0
    %229 = vmatprep.subr.mxu0 0.0
    %230 = vmatpush1.msra.mxu0 0.0
    %231 = vmatprep.subr.mxu0 0.0
    %232 = vmatpush1.msra.mxu0 0.0
    %233 = vmatprep.subr.mxu0 0.0
    %234 = vmatpush1.msra.mxu0 0.0
    %235 = vmatprep.subr.mxu0 0.0
    %236 = vmatpush1.msra.mxu0 0.0
    %237 = vmatprep.subr.mxu0 0.0
    %238 = vmatpush1.msra.mxu0 0.0
    %239 = vmatprep.subr.mxu0 0.0
    %240 = vmatpush1.msra.mxu0 0.0
    %241 = vmatprep.subr.mxu0 0.0
    %242 = vmatpush1.msra.mxu0 0.0
    %243 = vmatprep.subr.mxu0 0.0
    %244 = vmatpush1.msra.mxu0 0.0
    %245 = vmatprep.subr.mxu0 0.0
    %246 = vmatpush1.msra.mxu0 0.0
    %247 = vmatprep.subr.mxu0 0.0
    %248 = vmatpush1.msra.mxu0 0.0
    %249 = vmatprep.subr.mxu0 0.0
    %250 = vmatpush1.msra.mxu0 0.0
    %251 = vmatprep.subr.mxu0 0.0
    %252 = vmatpush1.msra.mxu0 0.0
    %253 = vmatprep.subr.mxu0 0.0
    %254 = vmatpush1.msra.mxu0 0.0
    %255 = vmatprep.subr.mxu0 0.0
    %256 = vmatpush1.msra.mxu0 0.0
    %257 = vmatprep.subr.mxu0 0.0
    %258 = vmatpush1.msra.mxu0 0.0
    %259 = vmatprep.mubr.f32.mxu0 0.0
    %260 = vmatmul.mubr.f32.gmra.mrb[0].mxu0 %v193
    %v261 = vpop.f32.mrb[0].mxu0
    %v262 = vadd.f32 %v190, %v261
    %v263 = vpop.f32.mrb[0].mxu0
    %264 = vdwg.mxu0
    %v265 = vtanh.pop %v262
    %v266 = vld [vmem:[#allocation10] sm:$0xff]
    %v267 = vld [vmem:[#allocation10 + $0x8] sm:$0xff]
    %v268 = vld [vmem:[#allocation10 + $0x10] sm:$0xff]
    %v269 = vld [vmem:[#allocation10 + $0x18] sm:$0xff]
    %v270 = vld [vmem:[%s7] sm:$0x1]
    %v272 = vlaneseq
    %v273 = vshrl.u32 %v272, 7
    %v274 = vsub.s32 0, %v273
    %v275 = vrot.slane %v270, %v274
    %v278 = vsel %vm106, %v265, 0
    %280 = vmatprep.subr.mxu0 0.0
    %281 = vmatpush1.msra.mxu0 %v266
    %282 = vmatprep.subr.mxu0 0.0
    %283 = vmatpush1.msra.mxu0 %v267
    %284 = vmatprep.subr.mxu0 0.0
    %285 = vmatpush1.msra.mxu0 %v268
    %286 = vmatprep.subr.mxu0 0.0
    %287 = vmatpush1.msra.mxu0 %v269
    %288 = vmatprep.subr.mxu0 0.0
    %289 = vmatpush1.msra.mxu0 0.0
    %290 = vmatprep.subr.mxu0 0.0
    %291 = vmatpush1.msra.mxu0 0.0
    %292 = vmatprep.subr.mxu0 0.0
    %293 = vmatpush1.msra.mxu0 0.0
    %294 = vmatprep.subr.mxu0 0.0
    %295 = vmatpush1.msra.mxu0 0.0
    %296 = vmatprep.subr.mxu0 0.0
    %297 = vmatpush1.msra.mxu0 0.0
    %298 = vmatprep.subr.mxu0 0.0
    %299 = vmatpush1.msra.mxu0 0.0
    %300 = vmatprep.subr.mxu0 0.0
    %301 = vmatpush1.msra.mxu0 0.0
    %302 = vmatprep.subr.mxu0 0.0
    %303 = vmatpush1.msra.mxu0 0.0
    %304 = vmatprep.subr.mxu0 0.0
    %305 = vmatpush1.msra.mxu0 0.0
    %306 = vmatprep.subr.mxu0 0.0
    %307 = vmatpush1.msra.mxu0 0.0
    %308 = vmatprep.subr.mxu0 0.0
    %309 = vmatpush1.msra.mxu0 0.0
    %310 = vmatprep.subr.mxu0 0.0
    %311 = vmatpush1.msra.mxu0 0.0
    %312 = vmatprep.subr.mxu0 0.0
    %313 = vmatpush1.msra.mxu0 0.0
    %314 = vmatprep.subr.mxu0 0.0
    %315 = vmatpush1.msra.mxu0 0.0
    %316 = vmatprep.subr.mxu0 0.0
    %317 = vmatpush1.msra.mxu0 0.0
    %318 = vmatprep.subr.mxu0 0.0
    %319 = vmatpush1.msra.mxu0 0.0
    %320 = vmatprep.subr.mxu0 0.0
    %321 = vmatpush1.msra.mxu0 0.0
    %322 = vmatprep.subr.mxu0 0.0
    %323 = vmatpush1.msra.mxu0 0.0
    %324 = vmatprep.subr.mxu0 0.0
    %325 = vmatpush1.msra.mxu0 0.0
    %326 = vmatprep.subr.mxu0 0.0
    %327 = vmatpush1.msra.mxu0 0.0
    %328 = vmatprep.subr.mxu0 0.0
    %329 = vmatpush1.msra.mxu0 0.0
    %330 = vmatprep.subr.mxu0 0.0
    %331 = vmatpush1.msra.mxu0 0.0
    %332 = vmatprep.subr.mxu0 0.0
    %333 = vmatpush1.msra.mxu0 0.0
    %334 = vmatprep.subr.mxu0 0.0
    %335 = vmatpush1.msra.mxu0 0.0
    %336 = vmatprep.subr.mxu0 0.0
    %337 = vmatpush1.msra.mxu0 0.0
    %338 = vmatprep.subr.mxu0 0.0
    %339 = vmatpush1.msra.mxu0 0.0
    %340 = vmatprep.subr.mxu0 0.0
    %341 = vmatpush1.msra.mxu0 0.0
    %342 = vmatprep.subr.mxu0 0.0
    %343 = vmatpush1.msra.mxu0 0.0
    %344 = vmatprep.mubr.f32.mxu0 0.0
    %345 = vmatmul.mubr.f32.gmra.mrb[0].mxu0 %v278
    %v346 = vpop.f32.mrb[0].mxu0
    %v347 = vadd.f32 %v275, %v346
    %v348 = vpop.f32.mrb[0].mxu0
    %349 = vdwg.mxu0
    %350 = vst [vmem:[#allocation11] sm:$0xff] %v347
    %v351 = vld [vmem:[#allocation5] sm:$0xff]
    %vm352 = vcmp.gt.f32.partialorder %v351, 0.0
    %v353 = vsel %vm352, 0.0, -3.4e+38
    %v354 = vadd.f32 %v347, %v353
    %vm355 = vcmask 130048
    %356 = vst.msk [vmem:[#allocation11] sm:$0xff] %vm355, %v354
    // Predicated region
    $region54: #{tpu_custom_call.1} parent=1 // pred_check
      _
    $region55: #{tpu_custom_call.1} parent=1 // pred_check_branch
      %358 = sbr.rel (0) target = $region57
    $region56: #{tpu_custom_call.1} parent=1 // pred_region
      %s360 = ssub.s32 128, 128
      %361 = vsyncadd [#allocation4], %s360
      %s363 = sshll.u32 [#allocation11], 4
      %s364 = int_to_ptr.vmem [resolvable:$true] %s363
      %366 = dma.vmem_to_hbm [thread:$0]  %s364, 128, %s8, [#allocation4]
    $region57: #{tpu_custom_call.1} parent=1 // pred_fallthru
      _
    // Predicated region
    $region58: #{tpu_custom_call.1} parent=1 // pred_check
      _
    $region59: #{tpu_custom_call.1} parent=1 // pred_check_branch
      %368 = sbr.rel (0) target = $region61
    $region60: #{tpu_custom_call.1} parent=1 // pred_region
      %369 = dma.done [#allocation4], 128
    $region61: #{tpu_custom_call.1} parent=1 // pred_fallthru
      _
    %370 = vsyncpa [#allocation3], 1
    %371 = vsyncpa [#allocation6], 1
    %372 = vsyncpa [#allocation9], 1
    %373 = vsyncpa [#allocation4], 1

</llo_original>
